<compile_context>
chip_gen: v7x
topology: tpu7x:2x2x1
jax: 0.10.0
libtpu: 0.0.40
codegen_flags: <defaults>
</compile_context>

<pallas_src>
import functools

import jax
import jax.numpy as jnp
from jax.experimental import pallas as pl
from jax.experimental.pallas import tpu as pltpu


# --------------------------------------------------------------------------- #
# Kernel
# --------------------------------------------------------------------------- #
def _attention_kernel(x_ref, lnb_ref, wqkv_ref, wout_ref, o_ref, *,
                      block_b, n_tokens, dim, heads, dim_head):
    """One grid step: `block_b` batch elements, fully resident in VMEM.

    Dataflow (m = block_b * n_tokens, inner = heads * dim_head):
      x (block_b,N,D) -> LayerNorm (f32)
        -> one (m,D)@(D,3*inner) MXU matmul (fused qkv, scale pre-folded)
        -> per-head attention (scores/softmax f32, MXU operands bf16)
        -> one (m,inner)@(inner,D) MXU matmul (output proj; head reduction
           fused into the MXU accumulator) -> + bias -> (block_b,N,D)
    """
    m = block_b * n_tokens
    inner = heads * dim_head

    # ---- load; (block_b, N, D) -> (m, D) merges leading dims only (cheap,
    #      no cross-lane relayout) ----
    x = x_ref[...].reshape(m, dim).astype(jnp.float32)

    # ---- LayerNorm (f32, eps=1e-5, biased variance -> matches torch) ----
    mean = jnp.mean(x, axis=-1, keepdims=True)
    var = jnp.mean((x - mean) ** 2, axis=-1, keepdims=True)
    xn = (x - mean) * jax.lax.rsqrt(var + 1e-5)
    xn = xn * lnb_ref[0] + lnb_ref[1]                      # gamma, beta

    # ---- fused qkv projection: ONE lane-wide (m, D) @ (D, 3*inner) matmul.
    #      Softmax scale is pre-folded into the q columns of Wqkv wrapper-side,
    #      so no in-kernel scale multiply is needed. ----
    qkv = jnp.dot(xn.astype(jnp.bfloat16), wqkv_ref[...],
                  preferred_element_type=jnp.float32)      # (m, 3*inner) f32
    qkv = qkv.astype(jnp.bfloat16)

    # ---- head split: static lane slices + leading-axis concat (RoPE-style
    #      layout ops; no general transpose, no replication of xn) ----
    def split_heads(region):                               # region: 0=q 1=k 2=v
        parts = []
        for h in range(heads):
            c0 = (region * heads + h) * dim_head
            parts.append(qkv[:, c0:c0 + dim_head]
                         .reshape(block_b, n_tokens, dim_head))
        return jnp.concatenate(parts, axis=0)              # (heads*block_b, N, dh)

    q = split_heads(0)
    k = split_heads(1)
    v = split_heads(2)

    # ---- token-local attention (scores / softmax kept in f32) ----
    s = jnp.einsum("bqd,bkd->bqk", q, k,
                   preferred_element_type=jnp.float32)     # (heads*block_b, N, N)
    s = s - jnp.max(s, axis=-1, keepdims=True)
    e = jnp.exp(s)
    attn = e * pl.reciprocal(jnp.sum(e, axis=-1, keepdims=True), approx=True)

    out = jnp.einsum("bqk,bkd->bqd", attn.astype(jnp.bfloat16), v,
                     preferred_element_type=jnp.float32)   # (heads*block_b, N, dh)
    out = out.astype(jnp.bfloat16)

    # ---- merge heads back to lanes: 'b h n d -> b n (h d)' ----
    out = jnp.concatenate(
        [out[h * block_b:(h + 1) * block_b].reshape(m, dim_head)
         for h in range(heads)],
        axis=-1)                                           # (m, inner) bf16

    # ---- output projection: single (m, inner) @ (inner, D) contraction,
    #      head reduction fused into the MXU accumulator (no VPU add-tree) ----
    y = jnp.dot(out, wout_ref[...], preferred_element_type=jnp.float32)
    y = y + lnb_ref[2]                                     # output bias

    o_ref[...] = y.reshape(block_b, n_tokens, dim).astype(o_ref.dtype)


# --------------------------------------------------------------------------- #
# Wrapper helpers (generation-aware sizing)
# --------------------------------------------------------------------------- #
def _vmem_limit_bytes():
    """~80% of physical VMEM (v7x: ~51 MiB of 64 MiB/TC, v5e/v6e: ~102 MiB of
    128 MiB), with a safe cross-generation fallback."""
    try:
        cap = int(pltpu.get_tpu_info().vmem_capacity_bytes)
        return max(32 * 1024 * 1024, min(int(cap * 0.8), 112 * 1024 * 1024))
    except Exception:
        return 48 * 1024 * 1024


def _num_tensorcores():
    """TensorCores per chip (v7x: 2, v5e/v6e: 1)."""
    try:
        info = pltpu.get_tpu_info()
        for name in ("num_tensorcores", "tensorcores_per_chip", "num_cores"):
            val = getattr(info, name, None)
            if val:
                return int(val)
    except Exception:
        pass
    try:
        if "v7" in jax.devices()[0].device_kind.lower():
            return 2
    except Exception:
        pass
    return 1


def _pick_block_b(batch, n_tokens, dim, heads, dim_head, vmem_limit, num_tc):
    """Maximize rows per grid step (grid=1 when everything fits); only split the
    batch across grid steps when there are 2 TensorCores AND per-step work is
    large enough to hide the ~0.35 us/step fixed grid overhead."""
    inner = heads * dim_head
    # rough per-batch-element VMEM working set (f32 score tensors dominate as N grows)
    per_b = (2 * 2 * n_tokens * dim * 4                 # x / out tiles, double-buffered
             + 3 * heads * n_tokens * n_tokens * 4      # s / e / attn (f32)
             + 8 * n_tokens * inner * 2                 # qkv / q / k / v / out (bf16)
             + 2 * n_tokens * inner * 4)                # slack for relayout copies
    bt = max(1, min(batch, (vmem_limit // 2) // max(per_b, 1)))
    flops_per_b = (2 * n_tokens * dim * 3 * inner
                   + 4 * heads * n_tokens * n_tokens * dim_head
                   + 2 * n_tokens * inner * dim)
    if num_tc >= 2 and batch >= num_tc and flops_per_b * batch >= num_tc * 4_000_000:
        bt = min(bt, max(1, batch // num_tc))           # give every TC a grid step
    while batch % bt:
        bt -= 1
    return bt


# --------------------------------------------------------------------------- #
# Forward
# --------------------------------------------------------------------------- #
def attention_forward(x, params, *, heads, dim_head, block_b=None):
    """x: (B, N, D) float32. params holds f32 weights (pre-transposed for x@W)."""
    B, N, D = x.shape
    inner = heads * dim_head
    scale = dim_head ** -0.5

    vmem_limit = _vmem_limit_bytes()
    num_tc = _num_tensorcores()
    if block_b is None:
        block_b = _pick_block_b(B, N, D, heads, dim_head, vmem_limit, num_tc)
    assert B % block_b == 0
    grid_b = B // block_b

    # ---- wrapper-side weight prep (layout plumbing, done once) ----
    wqkv = params["wqkv_t"]                                       # (D, 3*inner) f32
    # fold the softmax scale into the q columns, then cast to bf16
    wqkv = jnp.concatenate([wqkv[:, :inner] * scale, wqkv[:, inner:]], axis=1)
    wqkv = wqkv.astype(jnp.bfloat16)
    wout = params["wout_t"].astype(jnp.bfloat16)                  # (inner, D)
    # pack gamma / beta / output-bias into one (3, D) f32 operand (1 DMA, not 3)
    lnb = jnp.concatenate([params["gamma"], params["beta"], params["bout"]], axis=0)

    kernel = functools.partial(_attention_kernel, block_b=block_b, n_tokens=N,
                               dim=D, heads=heads, dim_head=dim_head)

    flops = (2 * B * N * D * 3 * inner            # qkv projection
             + 4 * B * heads * N * N * dim_head   # q@k^T + attn@v
             + 2 * B * N * inner * D)             # output projection
    bytes_accessed = (2 * x.size * 4 + (wqkv.size + wout.size) * 2 + lnb.size * 4)
    cost = pl.CostEstimate(flops=flops, transcendentals=B * heads * N * N,
                           bytes_accessed=bytes_accessed)

    # deeper input buffering only pays once there are enough grid steps to pipeline
    x_spec_kwargs = {}
    if grid_b >= 3:
        x_spec_kwargs["pipeline_mode"] = pl.Buffered(3)
    x_spec = pl.BlockSpec((block_b, N, D), lambda b: (b, 0, 0), **x_spec_kwargs)

    y = pl.pallas_call(
        kernel,
        out_shape=jax.ShapeDtypeStruct((B, N, D), x.dtype),
        grid_spec=pltpu.PrefetchScalarGridSpec(
            num_scalar_prefetch=0,
            grid=(grid_b,),
            in_specs=[
                x_spec,                                             # x (B, N, D)
                pl.BlockSpec((3, D), lambda b: (0, 0)),             # gamma/beta/b_out
                pl.BlockSpec((D, 3 * inner), lambda b: (0, 0)),     # Wqkv (scale folded)
                pl.BlockSpec((inner, D), lambda b: (0, 0)),         # Wout
            ],
            out_specs=pl.BlockSpec((block_b, N, D), lambda b: (b, 0, 0)),
        ),
        compiler_params=pltpu.CompilerParams(
            dimension_semantics=("parallel",),
            vmem_limit_bytes=vmem_limit,
        ),
        cost_estimate=cost,
    )(x, lnb, wqkv, wout)

    return y


# --------------------------------------------------------------------------- #
# Pure-JAX f32 reference (matches the PyTorch forward)
# --------------------------------------------------------------------------- #
def attention_reference(x, params, *, heads, dim_head):
    inner = heads * dim_head
    B, N, D = x.shape
    mean = jnp.mean(x, axis=-1, keepdims=True)
    var = jnp.mean((x - mean) ** 2, axis=-1, keepdims=True)
    xn = (x - mean) / jnp.sqrt(var + 1e-5) * params["gamma"][0] + params["beta"][0]
    qkv = xn @ params["wqkv_t"]
    q, k, v = jnp.split(qkv, 3, axis=-1)
    def to_heads(t):  # 'b n (h d) -> b h n d'
        return t.reshape(B, N, heads, dim_head).transpose(0, 2, 1, 3)
    q, k, v = map(to_heads, (q, k, v))
    dots = jnp.einsum("bhnd,bhmd->bhnm", q, k) * (dim_head ** -0.5)
    attn = jax.nn.softmax(dots, axis=-1)
    out = jnp.einsum("bhnm,bhmd->bhnd", attn, v)
    out = out.transpose(0, 2, 1, 3).reshape(B, N, inner)
    return out @ params["wout_t"] + params["bout"][0]


if __name__ == "__main__":
    # Small shapes consistent with the module: dim=32, heads=4, dim_head=16.
    B, N, D = 2, 8, 32
    HEADS, DIM_HEAD = 4, 16
    INNER = HEADS * DIM_HEAD

    key = jax.random.PRNGKey(0)
    kx, kqkv, kwo, kbo = jax.random.split(key, 4)

    x = jax.random.normal(kx, (B, N, D), dtype=jnp.float32)

    params = {
        "gamma": jnp.ones((1, D), jnp.float32),
        "beta": jnp.zeros((1, D), jnp.float32),
        # stored pre-transposed so forward computes x @ W (= x @ W_torch^T)
        "wqkv_t": jax.random.normal(kqkv, (D, 3 * INNER), jnp.float32) * 0.05,
        "wout_t": jax.random.normal(kwo, (INNER, D), jnp.float32) * 0.05,
        "bout": jax.random.normal(kbo, (1, D), jnp.float32) * 0.05,
    }

    y = attention_forward(x, params, heads=HEADS, dim_head=DIM_HEAD)
    y = jax.block_until_ready(y)

    y_ref = attention_reference(x, params, heads=HEADS, dim_head=DIM_HEAD)
    assert y.shape == x.shape
    # bf16 MXU operands + approx reciprocal -> compare at bf16-appropriate tolerance
    assert jnp.allclose(y, y_ref, atol=2e-2, rtol=2e-2), "mismatch vs reference"

    print("KERNEL_OK")
</pallas_src>

<mosaic_0001>
module attributes {stable_mosaic.version = 11 : i64} {
  func.func @_attention_kernel(%arg0: i32, %arg1: memref<2x8x32xf32, #tpu.memory_space<vmem>>, %arg2: memref<3x32xf32, #tpu.memory_space<vmem>>, %arg3: memref<32x192xbf16, #tpu.memory_space<vmem>>, %arg4: memref<64x32xbf16, #tpu.memory_space<vmem>>, %arg5: memref<2x8x32xf32, #tpu.memory_space<vmem>>) attributes {dimension_semantics = [#tpu.dimension_semantics<parallel>], iteration_bounds = array<i64: 1>, scalar_prefetch = 0 : i64, scratch_operands = 0 : i64, tpu.core_type = #tpu.core_type<tc>, window_params = [{transform_indices = @transform_0, window_bounds = array<i64: 2, 8, 32>}, {pipeline_mode = #tpu.pipeline_mode<synchronous>, transform_indices = @transform_1, window_bounds = array<i64: 3, 32>}, {pipeline_mode = #tpu.pipeline_mode<synchronous>, transform_indices = @transform_2, window_bounds = array<i64: 32, 192>}, {pipeline_mode = #tpu.pipeline_mode<synchronous>, transform_indices = @transform_3, window_bounds = array<i64: 64, 32>}, {transform_indices = @transform_4, window_bounds = array<i64: 2, 8, 32>}]} {
    %c0 = arith.constant 0 : index
    %c0_0 = arith.constant 0 : index
    %c0_1 = arith.constant 0 : index
    %0 = vector.load %arg1[%c0, %c0_0, %c0_1] : memref<2x8x32xf32, #tpu.memory_space<vmem>>, vector<2x8x32xf32>
    %1 = vector.shape_cast %0 : vector<2x8x32xf32> to vector<16x32xf32>
    %cst = arith.constant dense<0.000000e+00> : vector<16xf32>
    %2 = vector.multi_reduction <add>, %1, %cst [1] : vector<16x32xf32> to vector<16xf32>
    %3 = vector.shape_cast %2 : vector<16xf32> to vector<16x1xf32>
    %cst_2 = arith.constant 3.200000e+01 : f32
    %4 = vector.broadcast %cst_2 : f32 to vector<16x1xf32>
    %5 = arith.divf %3, %4 : vector<16x1xf32>
    %6 = vector.broadcast %5 : vector<16x1xf32> to vector<16x32xf32>
    %7 = arith.subf %1, %6 : vector<16x32xf32>
    %8 = arith.mulf %7, %7 : vector<16x32xf32>
    %cst_3 = arith.constant dense<0.000000e+00> : vector<16xf32>
    %9 = vector.multi_reduction <add>, %8, %cst_3 [1] : vector<16x32xf32> to vector<16xf32>
    %10 = vector.shape_cast %9 : vector<16xf32> to vector<16x1xf32>
    %cst_4 = arith.constant 3.200000e+01 : f32
    %11 = vector.broadcast %cst_4 : f32 to vector<16x1xf32>
    %12 = arith.divf %10, %11 : vector<16x1xf32>
    %13 = vector.broadcast %5 : vector<16x1xf32> to vector<16x32xf32>
    %14 = arith.subf %1, %13 : vector<16x32xf32>
    %cst_5 = arith.constant 9.99999974E-6 : f32
    %15 = vector.broadcast %cst_5 : f32 to vector<16x1xf32>
    %16 = arith.addf %12, %15 : vector<16x1xf32>
    %17 = math.rsqrt %16 : vector<16x1xf32>
    %18 = vector.broadcast %17 : vector<16x1xf32> to vector<16x32xf32>
    %19 = arith.mulf %14, %18 : vector<16x32xf32>
    %c0_6 = arith.constant 0 : index
    %c0_7 = arith.constant 0 : index
    %20 = vector.load %arg2[%c0_6, %c0_7] : memref<3x32xf32, #tpu.memory_space<vmem>>, vector<1x32xf32>
    %21 = vector.shape_cast %20 : vector<1x32xf32> to vector<32xf32>
    %22 = vector.shape_cast %21 : vector<32xf32> to vector<1x32xf32>
    %23 = vector.broadcast %22 : vector<1x32xf32> to vector<16x32xf32>
    %24 = arith.mulf %19, %23 : vector<16x32xf32>
    %c1 = arith.constant 1 : index
    %c0_8 = arith.constant 0 : index
    %25 = vector.load %arg2[%c1, %c0_8] : memref<3x32xf32, #tpu.memory_space<vmem>>, vector<1x32xf32>
    %26 = vector.shape_cast %25 : vector<1x32xf32> to vector<32xf32>
    %27 = vector.shape_cast %26 : vector<32xf32> to vector<1x32xf32>
    %28 = vector.broadcast %27 : vector<1x32xf32> to vector<16x32xf32>
    %29 = arith.addf %24, %28 : vector<16x32xf32>
    %30 = arith.truncf %29 : vector<16x32xf32> to vector<16x32xbf16>
    %c0_9 = arith.constant 0 : index
    %c0_10 = arith.constant 0 : index
    %31 = vector.load %arg3[%c0_9, %c0_10] : memref<32x192xbf16, #tpu.memory_space<vmem>>, vector<32x192xbf16>
    %cst_11 = arith.constant dense<0.000000e+00> : vector<16x192xf32>
    %32 = tpu.matmul %30, %31, %cst_11 {dimension_numbers = #tpu.dot_dimension_numbers<[1], [0], [0], [1], [0, 0, 1, 1], [], []>} : vector<16x32xbf16>, vector<32x192xbf16>, vector<16x192xf32> -> vector<16x192xf32>
    %33 = arith.truncf %32 : vector<16x192xf32> to vector<16x192xbf16>
    %34 = vector.extract_strided_slice %33 {offsets = [0, 0], sizes = [16, 16], strides = [1, 1]} : vector<16x192xbf16> to vector<16x16xbf16>
    %35 = vector.shape_cast %34 : vector<16x16xbf16> to vector<2x8x16xbf16>
    %36 = vector.extract_strided_slice %33 {offsets = [0, 16], sizes = [16, 16], strides = [1, 1]} : vector<16x192xbf16> to vector<16x16xbf16>
    %37 = vector.shape_cast %36 : vector<16x16xbf16> to vector<2x8x16xbf16>
    %38 = vector.extract_strided_slice %33 {offsets = [0, 32], sizes = [16, 16], strides = [1, 1]} : vector<16x192xbf16> to vector<16x16xbf16>
    %39 = vector.shape_cast %38 : vector<16x16xbf16> to vector<2x8x16xbf16>
    %40 = vector.extract_strided_slice %33 {offsets = [0, 48], sizes = [16, 16], strides = [1, 1]} : vector<16x192xbf16> to vector<16x16xbf16>
    %41 = vector.shape_cast %40 : vector<16x16xbf16> to vector<2x8x16xbf16>
    %42 = tpu.concatenate %35, %37, %39, %41 in 0 : vector<2x8x16xbf16>, vector<2x8x16xbf16>, vector<2x8x16xbf16>, vector<2x8x16xbf16> -> vector<8x8x16xbf16>
    %43 = vector.extract_strided_slice %33 {offsets = [0, 64], sizes = [16, 16], strides = [1, 1]} : vector<16x192xbf16> to vector<16x16xbf16>
    %44 = vector.shape_cast %43 : vector<16x16xbf16> to vector<2x8x16xbf16>
    %45 = vector.extract_strided_slice %33 {offsets = [0, 80], sizes = [16, 16], strides = [1, 1]} : vector<16x192xbf16> to vector<16x16xbf16>
    %46 = vector.shape_cast %45 : vector<16x16xbf16> to vector<2x8x16xbf16>
    %47 = vector.extract_strided_slice %33 {offsets = [0, 96], sizes = [16, 16], strides = [1, 1]} : vector<16x192xbf16> to vector<16x16xbf16>
    %48 = vector.shape_cast %47 : vector<16x16xbf16> to vector<2x8x16xbf16>
    %49 = vector.extract_strided_slice %33 {offsets = [0, 112], sizes = [16, 16], strides = [1, 1]} : vector<16x192xbf16> to vector<16x16xbf16>
    %50 = vector.shape_cast %49 : vector<16x16xbf16> to vector<2x8x16xbf16>
    %51 = tpu.concatenate %44, %46, %48, %50 in 0 : vector<2x8x16xbf16>, vector<2x8x16xbf16>, vector<2x8x16xbf16>, vector<2x8x16xbf16> -> vector<8x8x16xbf16>
    %52 = vector.extract_strided_slice %33 {offsets = [0, 128], sizes = [16, 16], strides = [1, 1]} : vector<16x192xbf16> to vector<16x16xbf16>
    %53 = vector.shape_cast %52 : vector<16x16xbf16> to vector<2x8x16xbf16>
    %54 = vector.extract_strided_slice %33 {offsets = [0, 144], sizes = [16, 16], strides = [1, 1]} : vector<16x192xbf16> to vector<16x16xbf16>
    %55 = vector.shape_cast %54 : vector<16x16xbf16> to vector<2x8x16xbf16>
    %56 = vector.extract_strided_slice %33 {offsets = [0, 160], sizes = [16, 16], strides = [1, 1]} : vector<16x192xbf16> to vector<16x16xbf16>
    %57 = vector.shape_cast %56 : vector<16x16xbf16> to vector<2x8x16xbf16>
    %58 = vector.extract_strided_slice %33 {offsets = [0, 176], sizes = [16, 16], strides = [1, 1]} : vector<16x192xbf16> to vector<16x16xbf16>
    %59 = vector.shape_cast %58 : vector<16x16xbf16> to vector<2x8x16xbf16>
    %60 = tpu.concatenate %53, %55, %57, %59 in 0 : vector<2x8x16xbf16>, vector<2x8x16xbf16>, vector<2x8x16xbf16>, vector<2x8x16xbf16> -> vector<8x8x16xbf16>
    "tpu.trace_start"() <{level = 10 : i32, message = "bqd,bkd->bqk"}> : () -> ()
    %cst_12 = arith.constant dense<0.000000e+00> : vector<8x8x8xf32>
    %61 = tpu.matmul %42, %51, %cst_12 {dimension_numbers = #tpu.dot_dimension_numbers<[2], [2], [1], [1], [0, 0, 0, 1, 1, 1], [0], [0]>} : vector<8x8x16xbf16>, vector<8x8x16xbf16>, vector<8x8x8xf32> -> vector<8x8x8xf32>
    "tpu.trace_stop"() : () -> ()
    %cst_13 = arith.constant dense<0xFF800000> : vector<8x8xf32>
    %62 = vector.multi_reduction <maximumf>, %61, %cst_13 [2] : vector<8x8x8xf32> to vector<8x8xf32>
    %63 = vector.shape_cast %62 : vector<8x8xf32> to vector<8x8x1xf32>
    %64 = vector.broadcast %63 : vector<8x8x1xf32> to vector<8x8x8xf32>
    %65 = arith.subf %61, %64 : vector<8x8x8xf32>
    %66 = math.exp %65 : vector<8x8x8xf32>
    %cst_14 = arith.constant dense<0.000000e+00> : vector<8x8xf32>
    %67 = vector.multi_reduction <add>, %66, %cst_14 [2] : vector<8x8x8xf32> to vector<8x8xf32>
    %68 = vector.shape_cast %67 : vector<8x8xf32> to vector<8x8x1xf32>
    %69 = tpu.reciprocal %68 {approx = true} : vector<8x8x1xf32> -> vector<8x8x1xf32>
    %70 = vector.broadcast %69 : vector<8x8x1xf32> to vector<8x8x8xf32>
    %71 = arith.mulf %66, %70 : vector<8x8x8xf32>
    %72 = arith.truncf %71 : vector<8x8x8xf32> to vector<8x8x8xbf16>
    "tpu.trace_start"() <{level = 10 : i32, message = "bqk,bkd->bqd"}> : () -> ()
    %cst_15 = arith.constant dense<0.000000e+00> : vector<8x8x16xf32>
    %73 = tpu.matmul %72, %60, %cst_15 {dimension_numbers = #tpu.dot_dimension_numbers<[2], [1], [1], [2], [0, 0, 0, 1, 1, 2], [0], [0]>} : vector<8x8x8xbf16>, vector<8x8x16xbf16>, vector<8x8x16xf32> -> vector<8x8x16xf32>
    "tpu.trace_stop"() : () -> ()
    %74 = arith.truncf %73 : vector<8x8x16xf32> to vector<8x8x16xbf16>
    %75 = vector.extract_strided_slice %74 {offsets = [0, 0, 0], sizes = [2, 8, 16], strides = [1, 1, 1]} : vector<8x8x16xbf16> to vector<2x8x16xbf16>
    %76 = vector.shape_cast %75 : vector<2x8x16xbf16> to vector<16x16xbf16>
    %77 = vector.extract_strided_slice %74 {offsets = [2, 0, 0], sizes = [2, 8, 16], strides = [1, 1, 1]} : vector<8x8x16xbf16> to vector<2x8x16xbf16>
    %78 = vector.shape_cast %77 : vector<2x8x16xbf16> to vector<16x16xbf16>
    %79 = vector.extract_strided_slice %74 {offsets = [4, 0, 0], sizes = [2, 8, 16], strides = [1, 1, 1]} : vector<8x8x16xbf16> to vector<2x8x16xbf16>
    %80 = vector.shape_cast %79 : vector<2x8x16xbf16> to vector<16x16xbf16>
    %81 = vector.extract_strided_slice %74 {offsets = [6, 0, 0], sizes = [2, 8, 16], strides = [1, 1, 1]} : vector<8x8x16xbf16> to vector<2x8x16xbf16>
    %82 = vector.shape_cast %81 : vector<2x8x16xbf16> to vector<16x16xbf16>
    %83 = tpu.concatenate %76, %78, %80, %82 in 1 : vector<16x16xbf16>, vector<16x16xbf16>, vector<16x16xbf16>, vector<16x16xbf16> -> vector<16x64xbf16>
    %c0_16 = arith.constant 0 : index
    %c0_17 = arith.constant 0 : index
    %84 = vector.load %arg4[%c0_16, %c0_17] : memref<64x32xbf16, #tpu.memory_space<vmem>>, vector<64x32xbf16>
    %cst_18 = arith.constant dense<0.000000e+00> : vector<16x32xf32>
    %85 = tpu.matmul %83, %84, %cst_18 {dimension_numbers = #tpu.dot_dimension_numbers<[1], [0], [0], [1], [0, 0, 1, 1], [], []>} : vector<16x64xbf16>, vector<64x32xbf16>, vector<16x32xf32> -> vector<16x32xf32>
    %c2 = arith.constant 2 : index
    %c0_19 = arith.constant 0 : index
    %86 = vector.load %arg2[%c2, %c0_19] : memref<3x32xf32, #tpu.memory_space<vmem>>, vector<1x32xf32>
    %87 = vector.shape_cast %86 : vector<1x32xf32> to vector<32xf32>
    %88 = vector.shape_cast %87 : vector<32xf32> to vector<1x32xf32>
    %89 = vector.broadcast %88 : vector<1x32xf32> to vector<16x32xf32>
    %90 = arith.addf %85, %89 : vector<16x32xf32>
    %91 = vector.shape_cast %90 : vector<16x32xf32> to vector<2x8x32xf32>
    %c0_20 = arith.constant 0 : index
    %c0_21 = arith.constant 0 : index
    %c0_22 = arith.constant 0 : index
    %92 = vector.load %arg5[%c0_20, %c0_21, %c0_22] : memref<2x8x32xf32, #tpu.memory_space<vmem>>, vector<2x8x32xf32>
    tpu.vector_store %arg5[%c0_20, %c0_21, %c0_22], %91 {strides = array<i32>} : memref<2x8x32xf32, #tpu.memory_space<vmem>>, vector<2x8x32xf32>,
    return
  }
  func.func @transform_0(%arg0: i32) -> (i32, i32, i32) {
    %c0_i32 = arith.constant 0 : i32
    %c0_i32_0 = arith.constant 0 : i32
    %c0_i32_1 = arith.constant 0 : i32
    return %arg0, %c0_i32, %c0_i32_0 : i32, i32, i32
  }
  func.func @transform_1(%arg0: i32) -> (i32, i32) {
    %c0_i32 = arith.constant 0 : i32
    %c0_i32_0 = arith.constant 0 : i32
    %c0_i32_1 = arith.constant 0 : i32
    return %c0_i32, %c0_i32_0 : i32, i32
  }
  func.func @transform_2(%arg0: i32) -> (i32, i32) {
    %c0_i32 = arith.constant 0 : i32
    %c0_i32_0 = arith.constant 0 : i32
    %c0_i32_1 = arith.constant 0 : i32
    return %c0_i32, %c0_i32_0 : i32, i32
  }
  func.func @transform_3(%arg0: i32) -> (i32, i32) {
    %c0_i32 = arith.constant 0 : i32
    %c0_i32_0 = arith.constant 0 : i32
    %c0_i32_1 = arith.constant 0 : i32
    return %c0_i32, %c0_i32_0 : i32, i32
  }
  func.func @transform_4(%arg0: i32) -> (i32, i32, i32) {
    %c0_i32 = arith.constant 0 : i32
    %c0_i32_0 = arith.constant 0 : i32
    %c0_i32_1 = arith.constant 0 : i32
    return %arg0, %c0_i32, %c0_i32_0 : i32, i32, i32
  }
}

</mosaic_0001>

<llo_original>
// kernel: tpu_custom_call.1
$region0: #{tpu_custom_call.1}
  #allocation0 [shape = 'u32[]', space=smem, size = 0x4, offset = 0x4, fixed_abs, tag = 'smem constant byte address 0x4 - core index']
  #allocation1 [shape = 'u32[144,128]{1,0:T(1,128)}', space=vmem, size = 0x12000, scoped, tag = 'internal scratch']
  %s0 = inlined_call_operand.vmem [shape: f32[2,8,32], index: 0, kind: input, shape index: {}]
  %s1 = inlined_call_operand.vmem [shape: f32[3,32], index: 1, kind: input, shape index: {}]
  %s2 = inlined_call_operand.vmem [shape: bf16[32,192], index: 2, kind: input, shape index: {}]
  %s3 = inlined_call_operand.vmem [shape: bf16[64,32], index: 3, kind: input, shape index: {}]
  %s4 = inlined_call_operand.hbm [shape: f32[2,8,32], index: 4, kind: output, shape index: {}]
  %s5 = sld [smem:[#allocation0]]
  $region26: #{tpu_custom_call.1} parent=0
    _
  %s7 = ssub.s32 1, %s5
  %s8 = scalar_select 0, %s7, %s5
  $region1: #{tpu_custom_call.1} parent=0
    #allocation2 [shape = 'u8[8192]{0}', space=vmem, size = 0x2000, scoped, tag = 'output window, operand 0, single buffered']
    #allocation3 [shape = 's32[1]{0}', space=sflag, size = 0x4, scoped, tag = 'scoped memory for tpu_custom_call.1']
    %9 = vsyncpa [#allocation3], 0
    // Predicated region
    $region2: #{tpu_custom_call.1} parent=1 // pred_check
      _
    $region3: #{tpu_custom_call.1} parent=1 // pred_check_branch
      %11 = sbr.rel (0) target = $region5
    $region4: #{tpu_custom_call.1} parent=1 // pred_region
      _
    $region5: #{tpu_custom_call.1} parent=1 // pred_fallthru
      _
    // Predicated region
    $region6: #{tpu_custom_call.1} parent=1 // pred_check
      _
    $region7: #{tpu_custom_call.1} parent=1 // pred_check_branch
      %13 = sbr.rel (0) target = $region9
    $region8: #{tpu_custom_call.1} parent=1 // pred_region
      _
    $region9: #{tpu_custom_call.1} parent=1 // pred_fallthru
      _
    // Predicated region
    $region10: #{tpu_custom_call.1} parent=1 // pred_check
      _
    $region11: #{tpu_custom_call.1} parent=1 // pred_check_branch
      %15 = sbr.rel (0) target = $region13
    $region12: #{tpu_custom_call.1} parent=1 // pred_region
      _
    $region13: #{tpu_custom_call.1} parent=1 // pred_fallthru
      _
    // Predicated region
    $region14: #{tpu_custom_call.1} parent=1 // pred_check
      _
    $region15: #{tpu_custom_call.1} parent=1 // pred_check_branch
      %17 = sbr.rel (0) target = $region17
    $region16: #{tpu_custom_call.1} parent=1 // pred_region
      _
    $region17: #{tpu_custom_call.1} parent=1 // pred_fallthru
      _
    %v19 = vld [vmem:[%s0] sm:$0xff]
    %v20 = vld [vmem:[%s0 + $0x8] sm:$0xff]
    %vm21 = vcmask 261120
    %v22 = vsel %vm21, %v19, 0.0
    %23 = vadd.xlane.f32.xlu0 %v22
    %v24 = vpop.xlane.xlu0 %23
    %v25 = vsel %vm21, %v20, 0.0
    %26 = vadd.xlane.f32.xlu0 %v25
    %v27 = vpop.xlane.xlu0 %26
    %v28 = vrcp.pop 32.0
    %v29 = vmul.f32 %v24, %v28
    %v30 = vmul.f32 %v27, %v28
    %v31 = vsub.f32 %v19, %v29
    %v32 = vsub.f32 %v20, %v30
    %v33 = vmul.f32 %v31, %v31
    %v34 = vmul.f32 %v32, %v32
    %v35 = vsel %vm21, %v33, 0.0
    %36 = vadd.xlane.f32.xlu0 %v35
    %v37 = vpop.xlane.xlu0 %36
    %v38 = vsel %vm21, %v34, 0.0
    %39 = vadd.xlane.f32.xlu0 %v38
    %v40 = vpop.xlane.xlu0 %39
    %v41 = vmul.f32 %v37, %v28
    %v42 = vmul.f32 %v40, %v28
    %v43 = vadd.f32 %v41, 1e-05
    %v44 = vadd.f32 %v42, 1e-05
    %v45 = vrsqrt.pop %v43
    %v46 = vrsqrt.pop %v44
    %v47 = vmul.f32 %v31, %v45
    %v48 = vmul.f32 %v32, %v46
    %v49 = vld [vmem:[%s1] sm:$0x1]
    %v50 = vlaneseq
    %v51 = vshrl.u32 %v50, 7
    %v52 = vsub.s32 0, %v51
    %v53 = vrot.slane %v49, %v52
    %v54 = vmul.f32 %v47, %v53
    %v55 = vmul.f32 %v48, %v53
    %v56 = vld [vmem:[%s1 + $0x1] sm:$0x1]
    %v57 = vlaneseq
    %v58 = vshrl.u32 %v57, 7
    %v59 = vsub.s32 0, %v58
    %v60 = vrot.slane %v56, %v59
    %v61 = vadd.f32 %v54, %v60
    %v62 = vadd.f32 %v55, %v60
    %v63 = vpack.c.bf16 %v62, %v61
    %v64 = vld [vmem:[%s2] sm:$0xff]
    %v65 = vld [vmem:[%s2 + $0x8] sm:$0xff]
    %v66 = vld [vmem:[%s2 + $0x10] sm:$0xff]
    %v67 = vld [vmem:[%s2 + $0x18] sm:$0xff]
    %v72 = vunpack.c.l.b16 %v64
    %v73 = vunpack.c.h.b16 %v64
    %v74 = vunpack.c.l.b16 %v65
    %v75 = vunpack.c.h.b16 %v65
    %v76 = vunpack.c.l.b16 %v66
    %v77 = vunpack.c.h.b16 %v66
    %v78 = vunpack.c.l.b16 %v67
    %v79 = vunpack.c.h.b16 %v67
    %v80 = vpack.c.b16 %v74, %v72
    %v81 = vpack.c.b16 %v75, %v73
    %v82 = vpack.c.b16 %v78, %v76
    %v83 = vpack.c.b16 %v79, %v77
    %v89 = vsel %vm21, %v63, 0
    %91 = vmatprep.subr.bf16.mxu0 %v81
    %92 = vmatpush1.bf16.msra.mxu0 %v80
    %93 = vmatprep.subr.bf16.mxu0 %v83
    %94 = vmatpush1.bf16.msra.mxu0 %v82
    %95 = vmatprep.subr.bf16.mxu0 0
    %96 = vmatpush1.bf16.msra.mxu0 0
    %97 = vmatprep.subr.bf16.mxu0 0
    %98 = vmatpush1.bf16.msra.mxu0 0
    %99 = vmatprep.subr.bf16.mxu0 0
    %100 = vmatpush1.bf16.msra.mxu0 0
    %101 = vmatprep.subr.bf16.mxu0 0
    %102 = vmatpush1.bf16.msra.mxu0 0
    %103 = vmatprep.subr.bf16.mxu0 0
    %104 = vmatpush1.bf16.msra.mxu0 0
    %105 = vmatprep.subr.bf16.mxu0 0
    %106 = vmatpush1.bf16.msra.mxu0 0
    %107 = vmatprep.subr.bf16.mxu0 0
    %108 = vmatpush1.bf16.msra.mxu0 0
    %109 = vmatprep.subr.bf16.mxu0 0
    %110 = vmatpush1.bf16.msra.mxu0 0
    %111 = vmatprep.subr.bf16.mxu0 0
    %112 = vmatpush1.bf16.msra.mxu0 0
    %113 = vmatprep.subr.bf16.mxu0 0
    %114 = vmatpush1.bf16.msra.mxu0 0
    %115 = vmatprep.subr.bf16.mxu0 0
    %116 = vmatpush1.bf16.msra.mxu0 0
    %117 = vmatprep.subr.bf16.mxu0 0
    %118 = vmatpush1.bf16.msra.mxu0 0
    %119 = vmatprep.subr.bf16.mxu0 0
    %120 = vmatpush1.bf16.msra.mxu0 0
    %121 = vmatprep.subr.bf16.mxu0 0
    %122 = vmatpush1.bf16.msra.mxu0 0
    %123 = vmatprep.mubr.bf16.mxu0 0
    %124 = vmatmul.mubr.bf16.gmra.mrb[0].mxu0 %v89
    %v125 = vpop.f32.mrb[0].mxu0
    %v126 = vadd.f32 0.0, %v125
    %v127 = vpop.f32.mrb[0].mxu0
    %v128 = vadd.f32 0.0, %v127
    %v129 = vpop.f32.mrb[0].mxu0
    %v130 = vadd.f32 0.0, %v129
    %v131 = vpop.f32.mrb[0].mxu0
    %v132 = vadd.f32 0.0, %v131
    %133 = vdwg.mxu0
    %v134 = vpack.c.bf16 %v130, %v126
    %v135 = vpack.c.bf16 %v132, %v128
    %v137 = vunpack.c.l.b16 %v134
    %v138 = vunpack.c.h.b16 %v134
    %v139 = vpack.c.b16 %v137, %v137
    %v140 = vpack.c.b16 %v138, %v138
    %141 = vrot.lane.b32.xlu0 %v139, 112
    %v142 = vpop.permute.xlu0 %141
    %143 = vrot.lane.b32.xlu0 %v140, 112
    %v144 = vpop.permute.xlu0 %143
    %145 = vrot.lane.b32.xlu0 %v139, 96
    %v146 = vpop.permute.xlu0 %145
    %147 = vrot.lane.b32.xlu0 %v140, 96
    %v148 = vpop.permute.xlu0 %147
    %149 = vrot.lane.b32.xlu0 %v139, 80
    %v150 = vpop.permute.xlu0 %149
    %151 = vrot.lane.b32.xlu0 %v140, 80
    %v152 = vpop.permute.xlu0 %151
    %v154 = vunpack.c.l.b16 %v135
    %v155 = vunpack.c.h.b16 %v135
    %v156 = vpack.c.b16 %v154, %v154
    %v157 = vpack.c.b16 %v155, %v155
    %158 = vrot.lane.b32.xlu0 %v156, 112
    %v159 = vpop.permute.xlu0 %158
    %160 = vrot.lane.b32.xlu0 %v157, 112
    %v161 = vpop.permute.xlu0 %160
    %162 = vrot.lane.b32.xlu0 %v156, 96
    %v163 = vpop.permute.xlu0 %162
    %164 = vrot.lane.b32.xlu0 %v157, 96
    %v165 = vpop.permute.xlu0 %164
    %166 = vrot.lane.b32.xlu0 %v156, 80
    %v167 = vpop.permute.xlu0 %166
    %168 = vrot.lane.b32.xlu0 %v157, 80
    %v169 = vpop.permute.xlu0 %168
    %170 = vrot.lane.b32.xlu0 %v139, 64
    %v171 = vpop.permute.xlu0 %170
    %vm172 = vcmask 130048
    %v174 = vsel %vm172, %v139, 0
    %v177 = vsel %vm172, %v171, 0
    %179 = vmatprep.subr.bf16.mxu0 0
    %180 = vmatpush1.bf16.xpose.msra.mxu0 %v177
    %181 = vmatprep.subr.bf16.mxu0 0
    %182 = vmatpush1.bf16.xpose.msra.mxu0 0
    %183 = vmatprep.subr.bf16.mxu0 0
    %184 = vmatpush1.bf16.xpose.msra.mxu0 0
    %185 = vmatprep.subr.bf16.mxu0 0
    %186 = vmatpush1.bf16.xpose.msra.mxu0 0
    %187 = vmatprep.subr.bf16.mxu0 0
    %188 = vmatpush1.bf16.xpose.msra.mxu0 0
    %189 = vmatprep.subr.bf16.mxu0 0
    %190 = vmatpush1.bf16.xpose.msra.mxu0 0
    %191 = vmatprep.subr.bf16.mxu0 0
    %192 = vmatpush1.bf16.xpose.msra.mxu0 0
    %193 = vmatprep.subr.bf16.mxu0 0
    %194 = vmatpush1.bf16.xpose.msra.mxu0 0
    %195 = vmatprep.subr.bf16.mxu0 0
    %196 = vmatpush1.bf16.xpose.msra.mxu0 0
    %197 = vmatprep.subr.bf16.mxu0 0
    %198 = vmatpush1.bf16.xpose.msra.mxu0 0
    %199 = vmatprep.subr.bf16.mxu0 0
    %200 = vmatpush1.bf16.xpose.msra.mxu0 0
    %201 = vmatprep.subr.bf16.mxu0 0
    %202 = vmatpush1.bf16.xpose.msra.mxu0 0
    %203 = vmatprep.subr.bf16.mxu0 0
    %204 = vmatpush1.bf16.xpose.msra.mxu0 0
    %205 = vmatprep.subr.bf16.mxu0 0
    %206 = vmatpush1.bf16.xpose.msra.mxu0 0
    %207 = vmatprep.subr.bf16.mxu0 0
    %208 = vmatpush1.bf16.xpose.msra.mxu0 0
    %209 = vmatprep.subr.bf16.mxu0 0
    %210 = vmatpush1.bf16.xpose.msra.mxu0 0
    %211 = vmatprep.mubr.bf16.mxu0 0
    %212 = vmatmul.mubr.bf16.gmra.mrb[0].mxu0 %v174
    %v213 = vpop.f32.mrb[0].mxu0
    %v214 = vadd.f32 0.0, %v213
    %v215 = vpop.f32.mrb[0].mxu0
    %v216 = vpop.f32.mrb[0].mxu0
    %v217 = vpop.f32.mrb[0].mxu0
    %218 = vdwg.mxu0
    %219 = vrot.lane.b32.xlu0 %v140, 64
    %v220 = vpop.permute.xlu0 %219
    %v222 = vsel %vm172, %v140, 0
    %v225 = vsel %vm172, %v220, 0
    %227 = vmatprep.subr.bf16.mxu0 0
    %228 = vmatpush1.bf16.xpose.msra.mxu0 %v225
    %229 = vmatprep.subr.bf16.mxu0 0
    %230 = vmatpush1.bf16.xpose.msra.mxu0 0
    %231 = vmatprep.subr.bf16.mxu0 0
    %232 = vmatpush1.bf16.xpose.msra.mxu0 0
    %233 = vmatprep.subr.bf16.mxu0 0
    %234 = vmatpush1.bf16.xpose.msra.mxu0 0
    %235 = vmatprep.subr.bf16.mxu0 0
    %236 = vmatpush1.bf16.xpose.msra.mxu0 0
    %237 = vmatprep.subr.bf16.mxu0 0
    %238 = vmatpush1.bf16.xpose.msra.mxu0 0
    %239 = vmatprep.subr.bf16.mxu0 0
    %240 = vmatpush1.bf16.xpose.msra.mxu0 0
    %241 = vmatprep.subr.bf16.mxu0 0
    %242 = vmatpush1.bf16.xpose.msra.mxu0 0
    %243 = vmatprep.subr.bf16.mxu0 0
    %244 = vmatpush1.bf16.xpose.msra.mxu0 0
    %245 = vmatprep.subr.bf16.mxu0 0
    %246 = vmatpush1.bf16.xpose.msra.mxu0 0
    %247 = vmatprep.subr.bf16.mxu0 0
    %248 = vmatpush1.bf16.xpose.msra.mxu0 0
    %249 = vmatprep.subr.bf16.mxu0 0
    %250 = vmatpush1.bf16.xpose.msra.mxu0 0
    %251 = vmatprep.subr.bf16.mxu0 0
    %252 = vmatpush1.bf16.xpose.msra.mxu0 0
    %253 = vmatprep.subr.bf16.mxu0 0
    %254 = vmatpush1.bf16.xpose.msra.mxu0 0
    %255 = vmatprep.subr.bf16.mxu0 0
    %256 = vmatpush1.bf16.xpose.msra.mxu0 0
    %257 = vmatprep.subr.bf16.mxu0 0
    %258 = vmatpush1.bf16.xpose.msra.mxu0 0
    %259 = vmatprep.mubr.bf16.mxu0 0
    %260 = vmatmul.mubr.bf16.gmra.mrb[0].mxu0 %v222
    %v261 = vpop.f32.mrb[0].mxu0
    %v262 = vadd.f32 0.0, %v261
    %v263 = vpop.f32.mrb[0].mxu0
    %v264 = vpop.f32.mrb[0].mxu0
    %v265 = vpop.f32.mrb[0].mxu0
    %266 = vdwg.mxu0
    %v267 = vunpack.c.l.b16 %v142
    %v268 = vpack.c.b16 %v267, %v267
    %269 = vrot.lane.b32.xlu0 %v268, 64
    %v270 = vpop.permute.xlu0 %269
    %v272 = vsel %vm172, %v142, 0
    %v275 = vsel %vm172, %v270, 0
    %277 = vmatprep.subr.bf16.mxu0 0
    %278 = vmatpush1.bf16.xpose.msra.mxu0 %v275
    %279 = vmatprep.subr.bf16.mxu0 0
    %280 = vmatpush1.bf16.xpose.msra.mxu0 0
    %281 = vmatprep.subr.bf16.mxu0 0
    %282 = vmatpush1.bf16.xpose.msra.mxu0 0
    %283 = vmatprep.subr.bf16.mxu0 0
    %284 = vmatpush1.bf16.xpose.msra.mxu0 0
    %285 = vmatprep.subr.bf16.mxu0 0
    %286 = vmatpush1.bf16.xpose.msra.mxu0 0
    %287 = vmatprep.subr.bf16.mxu0 0
    %288 = vmatpush1.bf16.xpose.msra.mxu0 0
    %289 = vmatprep.subr.bf16.mxu0 0
    %290 = vmatpush1.bf16.xpose.msra.mxu0 0
    %291 = vmatprep.subr.bf16.mxu0 0
    %292 = vmatpush1.bf16.xpose.msra.mxu0 0
    %293 = vmatprep.subr.bf16.mxu0 0
    %294 = vmatpush1.bf16.xpose.msra.mxu0 0
    %295 = vmatprep.subr.bf16.mxu0 0
    %296 = vmatpush1.bf16.xpose.msra.mxu0 0
    %297 = vmatprep.subr.bf16.mxu0 0
    %298 = vmatpush1.bf16.xpose.msra.mxu0 0
    %299 = vmatprep.subr.bf16.mxu0 0
    %300 = vmatpush1.bf16.xpose.msra.mxu0 0
    %301 = vmatprep.subr.bf16.mxu0 0
    %302 = vmatpush1.bf16.xpose.msra.mxu0 0
    %303 = vmatprep.subr.bf16.mxu0 0
    %304 = vmatpush1.bf16.xpose.msra.mxu0 0
    %305 = vmatprep.subr.bf16.mxu0 0
    %306 = vmatpush1.bf16.xpose.msra.mxu0 0
    %307 = vmatprep.subr.bf16.mxu0 0
    %308 = vmatpush1.bf16.xpose.msra.mxu0 0
    %309 = vmatprep.mubr.bf16.mxu0 0
    %310 = vmatmul.mubr.bf16.gmra.mrb[0].mxu0 %v272
    %v311 = vpop.f32.mrb[0].mxu0
    %v312 = vadd.f32 0.0, %v311
    %v313 = vpop.f32.mrb[0].mxu0
    %v314 = vpop.f32.mrb[0].mxu0
    %v315 = vpop.f32.mrb[0].mxu0
    %316 = vdwg.mxu0
    %v317 = vunpack.c.l.b16 %v144
    %v318 = vpack.c.b16 %v317, %v317
    %319 = vrot.lane.b32.xlu0 %v318, 64
    %v320 = vpop.permute.xlu0 %319
    %v322 = vsel %vm172, %v144, 0
    %v325 = vsel %vm172, %v320, 0
    %327 = vmatprep.subr.bf16.mxu0 0
    %328 = vmatpush1.bf16.xpose.msra.mxu0 %v325
    %329 = vmatprep.subr.bf16.mxu0 0
    %330 = vmatpush1.bf16.xpose.msra.mxu0 0
    %331 = vmatprep.subr.bf16.mxu0 0
    %332 = vmatpush1.bf16.xpose.msra.mxu0 0
    %333 = vmatprep.subr.bf16.mxu0 0
    %334 = vmatpush1.bf16.xpose.msra.mxu0 0
    %335 = vmatprep.subr.bf16.mxu0 0
    %336 = vmatpush1.bf16.xpose.msra.mxu0 0
    %337 = vmatprep.subr.bf16.mxu0 0
    %338 = vmatpush1.bf16.xpose.msra.mxu0 0
    %339 = vmatprep.subr.bf16.mxu0 0
    %340 = vmatpush1.bf16.xpose.msra.mxu0 0
    %341 = vmatprep.subr.bf16.mxu0 0
    %342 = vmatpush1.bf16.xpose.msra.mxu0 0
    %343 = vmatprep.subr.bf16.mxu0 0
    %344 = vmatpush1.bf16.xpose.msra.mxu0 0
    %345 = vmatprep.subr.bf16.mxu0 0
    %346 = vmatpush1.bf16.xpose.msra.mxu0 0
    %347 = vmatprep.subr.bf16.mxu0 0
    %348 = vmatpush1.bf16.xpose.msra.mxu0 0
    %349 = vmatprep.subr.bf16.mxu0 0
    %350 = vmatpush1.bf16.xpose.msra.mxu0 0
    %351 = vmatprep.subr.bf16.mxu0 0
    %352 = vmatpush1.bf16.xpose.msra.mxu0 0
    %353 = vmatprep.subr.bf16.mxu0 0
    %354 = vmatpush1.bf16.xpose.msra.mxu0 0
    %355 = vmatprep.subr.bf16.mxu0 0
    %356 = vmatpush1.bf16.xpose.msra.mxu0 0
    %357 = vmatprep.subr.bf16.mxu0 0
    %358 = vmatpush1.bf16.xpose.msra.mxu0 0
    %359 = vmatprep.mubr.bf16.mxu0 0
    %360 = vmatmul.mubr.bf16.gmra.mrb[0].mxu0 %v322
    %v361 = vpop.f32.mrb[0].mxu0
    %v362 = vadd.f32 0.0, %v361
    %v363 = vpop.f32.mrb[0].mxu0
    %v364 = vpop.f32.mrb[0].mxu0
    %v365 = vpop.f32.mrb[0].mxu0
    %366 = vdwg.mxu0
    %v367 = vunpack.c.l.b16 %v146
    %v368 = vpack.c.b16 %v367, %v367
    %369 = vrot.lane.b32.xlu0 %v368, 64
    %v370 = vpop.permute.xlu0 %369
    %v372 = vsel %vm172, %v146, 0
    %v375 = vsel %vm172, %v370, 0
    %377 = vmatprep.subr.bf16.mxu0 0
    %378 = vmatpush1.bf16.xpose.msra.mxu0 %v375
    %379 = vmatprep.subr.bf16.mxu0 0
    %380 = vmatpush1.bf16.xpose.msra.mxu0 0
    %381 = vmatprep.subr.bf16.mxu0 0
    %382 = vmatpush1.bf16.xpose.msra.mxu0 0
    %383 = vmatprep.subr.bf16.mxu0 0
    %384 = vmatpush1.bf16.xpose.msra.mxu0 0
    %385 = vmatprep.subr.bf16.mxu0 0
    %386 = vmatpush1.bf16.xpose.msra.mxu0 0
    %387 = vmatprep.subr.bf16.mxu0 0
    %388 = vmatpush1.bf16.xpose.msra.mxu0 0
    %389 = vmatprep.subr.bf16.mxu0 0
    %390 = vmatpush1.bf16.xpose.msra.mxu0 0
    %391 = vmatprep.subr.bf16.mxu0 0
    %392 = vmatpush1.bf16.xpose.msra.mxu0 0
    %393 = vmatprep.subr.bf16.mxu0 0
    %394 = vmatpush1.bf16.xpose.msra.mxu0 0
    %395 = vmatprep.subr.bf16.mxu0 0
    %396 = vmatpush1.bf16.xpose.msra.mxu0 0
    %397 = vmatprep.subr.bf16.mxu0 0
    %398 = vmatpush1.bf16.xpose.msra.mxu0 0
    %399 = vmatprep.subr.bf16.mxu0 0
    %400 = vmatpush1.bf16.xpose.msra.mxu0 0
    %401 = vmatprep.subr.bf16.mxu0 0
    %402 = vmatpush1.bf16.xpose.msra.mxu0 0
    %403 = vmatprep.subr.bf16.mxu0 0
    %404 = vmatpush1.bf16.xpose.msra.mxu0 0
    %405 = vmatprep.subr.bf16.mxu0 0
    %406 = vmatpush1.bf16.xpose.msra.mxu0 0
    %407 = vmatprep.subr.bf16.mxu0 0
    %408 = vmatpush1.bf16.xpose.msra.mxu0 0
    %409 = vmatprep.mubr.bf16.mxu0 0
    %410 = vmatmul.mubr.bf16.gmra.mrb[0].mxu0 %v372
    %v411 = vpop.f32.mrb[0].mxu0
    %v412 = vadd.f32 0.0, %v411
    %v413 = vpop.f32.mrb[0].mxu0
    %v414 = vpop.f32.mrb[0].mxu0
    %v415 = vpop.f32.mrb[0].mxu0
    %416 = vdwg.mxu0
    %v417 = vunpack.c.l.b16 %v148
    %v418 = vpack.c.b16 %v417, %v417
    %419 = vrot.lane.b32.xlu0 %v418, 64
    %v420 = vpop.permute.xlu0 %419
    %v422 = vsel %vm172, %v148, 0
    %v425 = vsel %vm172, %v420, 0
    %427 = vmatprep.subr.bf16.mxu0 0
    %428 = vmatpush1.bf16.xpose.msra.mxu0 %v425
    %429 = vmatprep.subr.bf16.mxu0 0
    %430 = vmatpush1.bf16.xpose.msra.mxu0 0
    %431 = vmatprep.subr.bf16.mxu0 0
    %432 = vmatpush1.bf16.xpose.msra.mxu0 0
    %433 = vmatprep.subr.bf16.mxu0 0
    %434 = vmatpush1.bf16.xpose.msra.mxu0 0
    %435 = vmatprep.subr.bf16.mxu0 0
    %436 = vmatpush1.bf16.xpose.msra.mxu0 0
    %437 = vmatprep.subr.bf16.mxu0 0
    %438 = vmatpush1.bf16.xpose.msra.mxu0 0
    %439 = vmatprep.subr.bf16.mxu0 0
    %440 = vmatpush1.bf16.xpose.msra.mxu0 0
    %441 = vmatprep.subr.bf16.mxu0 0
    %442 = vmatpush1.bf16.xpose.msra.mxu0 0
    %443 = vmatprep.subr.bf16.mxu0 0
    %444 = vmatpush1.bf16.xpose.msra.mxu0 0
    %445 = vmatprep.subr.bf16.mxu0 0
    %446 = vmatpush1.bf16.xpose.msra.mxu0 0
    %447 = vmatprep.subr.bf16.mxu0 0
    %448 = vmatpush1.bf16.xpose.msra.mxu0 0
    %449 = vmatprep.subr.bf16.mxu0 0
    %450 = vmatpush1.bf16.xpose.msra.mxu0 0
    %451 = vmatprep.subr.bf16.mxu0 0
    %452 = vmatpush1.bf16.xpose.msra.mxu0 0
    %453 = vmatprep.subr.bf16.mxu0 0
    %454 = vmatpush1.bf16.xpose.msra.mxu0 0
    %455 = vmatprep.subr.bf16.mxu0 0
    %456 = vmatpush1.bf16.xpose.msra.mxu0 0
    %457 = vmatprep.subr.bf16.mxu0 0
    %458 = vmatpush1.bf16.xpose.msra.mxu0 0
    %459 = vmatprep.mubr.bf16.mxu0 0
    %460 = vmatmul.mubr.bf16.gmra.mrb[0].mxu0 %v422
    %v461 = vpop.f32.mrb[0].mxu0
    %v462 = vadd.f32 0.0, %v461
    %v463 = vpop.f32.mrb[0].mxu0
    %v464 = vpop.f32.mrb[0].mxu0
    %v465 = vpop.f32.mrb[0].mxu0
    %466 = vdwg.mxu0
    %v467 = vunpack.c.l.b16 %v150
    %v468 = vpack.c.b16 %v467, %v467
    %469 = vrot.lane.b32.xlu0 %v468, 64
    %v470 = vpop.permute.xlu0 %469
    %v472 = vsel %vm172, %v150, 0
    %v475 = vsel %vm172, %v470, 0
    %477 = vmatprep.subr.bf16.mxu0 0
    %478 = vmatpush1.bf16.xpose.msra.mxu0 %v475
    %479 = vmatprep.subr.bf16.mxu0 0
    %480 = vmatpush1.bf16.xpose.msra.mxu0 0
    %481 = vmatprep.subr.bf16.mxu0 0
    %482 = vmatpush1.bf16.xpose.msra.mxu0 0
    %483 = vmatprep.subr.bf16.mxu0 0
    %484 = vmatpush1.bf16.xpose.msra.mxu0 0
    %485 = vmatprep.subr.bf16.mxu0 0
    %486 = vmatpush1.bf16.xpose.msra.mxu0 0
    %487 = vmatprep.subr.bf16.mxu0 0
    %488 = vmatpush1.bf16.xpose.msra.mxu0 0
    %489 = vmatprep.subr.bf16.mxu0 0
    %490 = vmatpush1.bf16.xpose.msra.mxu0 0
    %491 = vmatprep.subr.bf16.mxu0 0
    %492 = vmatpush1.bf16.xpose.msra.mxu0 0
    %493 = vmatprep.subr.bf16.mxu0 0
    %494 = vmatpush1.bf16.xpose.msra.mxu0 0
    %495 = vmatprep.subr.bf16.mxu0 0
    %496 = vmatpush1.bf16.xpose.msra.mxu0 0
    %497 = vmatprep.subr.bf16.mxu0 0
    %498 = vmatpush1.bf16.xpose.msra.mxu0 0
    %499 = vmatprep.subr.bf16.mxu0 0
    %500 = vmatpush1.bf16.xpose.msra.mxu0 0
    %501 = vmatprep.subr.bf16.mxu0 0
    %502 = vmatpush1.bf16.xpose.msra.mxu0 0
    %503 = vmatprep.subr.bf16.mxu0 0
    %504 = vmatpush1.bf16.xpose.msra.mxu0 0
    %505 = vmatprep.subr.bf16.mxu0 0
    %506 = vmatpush1.bf16.xpose.msra.mxu0 0
    %507 = vmatprep.subr.bf16.mxu0 0
    %508 = vmatpush1.bf16.xpose.msra.mxu0 0
    %509 = vmatprep.mubr.bf16.mxu0 0
    %510 = vmatmul.mubr.bf16.gmra.mrb[0].mxu0 %v472
    %v511 = vpop.f32.mrb[0].mxu0
    %v512 = vadd.f32 0.0, %v511
    %v513 = vpop.f32.mrb[0].mxu0
    %v514 = vpop.f32.mrb[0].mxu0
    %v515 = vpop.f32.mrb[0].mxu0
    %516 = vdwg.mxu0
    %v517 = vunpack.c.l.b16 %v152
    %v518 = vpack.c.b16 %v517, %v517
    %519 = vrot.lane.b32.xlu0 %v518, 64
    %v520 = vpop.permute.xlu0 %519
    %v522 = vsel %vm172, %v152, 0
    %v525 = vsel %vm172, %v520, 0
    %527 = vmatprep.subr.bf16.mxu0 0
    %528 = vmatpush1.bf16.xpose.msra.mxu0 %v525
    %529 = vmatprep.subr.bf16.mxu0 0
    %530 = vmatpush1.bf16.xpose.msra.mxu0 0
    %531 = vmatprep.subr.bf16.mxu0 0
    %532 = vmatpush1.bf16.xpose.msra.mxu0 0
    %533 = vmatprep.subr.bf16.mxu0 0
    %534 = vmatpush1.bf16.xpose.msra.mxu0 0
    %535 = vmatprep.subr.bf16.mxu0 0
    %536 = vmatpush1.bf16.xpose.msra.mxu0 0
    %537 = vmatprep.subr.bf16.mxu0 0
    %538 = vmatpush1.bf16.xpose.msra.mxu0 0
    %539 = vmatprep.subr.bf16.mxu0 0
    %540 = vmatpush1.bf16.xpose.msra.mxu0 0
    %541 = vmatprep.subr.bf16.mxu0 0
    %542 = vmatpush1.bf16.xpose.msra.mxu0 0
    %543 = vmatprep.subr.bf16.mxu0 0
    %544 = vmatpush1.bf16.xpose.msra.mxu0 0
    %545 = vmatprep.subr.bf16.mxu0 0
    %546 = vmatpush1.bf16.xpose.msra.mxu0 0
    %547 = vmatprep.subr.bf16.mxu0 0
    %548 = vmatpush1.bf16.xpose.msra.mxu0 0
    %549 = vmatprep.subr.bf16.mxu0 0
    %550 = vmatpush1.bf16.xpose.msra.mxu0 0
    %551 = vmatprep.subr.bf16.mxu0 0
    %552 = vmatpush1.bf16.xpose.msra.mxu0 0
    %553 = vmatprep.subr.bf16.mxu0 0
    %554 = vmatpush1.bf16.xpose.msra.mxu0 0
    %555 = vmatprep.subr.bf16.mxu0 0
    %556 = vmatpush1.bf16.xpose.msra.mxu0 0
    %557 = vmatprep.subr.bf16.mxu0 0
    %558 = vmatpush1.bf16.xpose.msra.mxu0 0
    %559 = vmatprep.mubr.bf16.mxu0 0
    %560 = vmatmul.mubr.bf16.gmra.mrb[0].mxu0 %v522
    %v561 = vpop.f32.mrb[0].mxu0
    %v562 = vadd.f32 0.0, %v561
    %v563 = vpop.f32.mrb[0].mxu0
    %v564 = vpop.f32.mrb[0].mxu0
    %v565 = vpop.f32.mrb[0].mxu0
    %566 = vdwg.mxu0
    %vm567 = vcmask 64512
    %v568 = vsel %vm567, %v214, -inf
    %569 = vmax.xlane.f32.xlu0 %v568
    %v570 = vpop.xlane.xlu0 %569
    %v571 = vsel %vm567, %v262, -inf
    %572 = vmax.xlane.f32.xlu0 %v571
    %v573 = vpop.xlane.xlu0 %572
    %v574 = vsel %vm567, %v312, -inf
    %575 = vmax.xlane.f32.xlu0 %v574
    %v576 = vpop.xlane.xlu0 %575
    %v577 = vsel %vm567, %v362, -inf
    %578 = vmax.xlane.f32.xlu0 %v577
    %v579 = vpop.xlane.xlu0 %578
    %v580 = vsel %vm567, %v412, -inf
    %581 = vmax.xlane.f32.xlu0 %v580
    %v582 = vpop.xlane.xlu0 %581
    %v583 = vsel %vm567, %v462, -inf
    %584 = vmax.xlane.f32.xlu0 %v583
    %v585 = vpop.xlane.xlu0 %584
    %v586 = vsel %vm567, %v512, -inf
    %587 = vmax.xlane.f32.xlu0 %v586
    %v588 = vpop.xlane.xlu0 %587
    %v589 = vsel %vm567, %v562, -inf
    %590 = vmax.xlane.f32.xlu0 %v589
    %v591 = vpop.xlane.xlu0 %590
    %v592 = vsub.f32 %v214, %v570
    %v593 = vsub.f32 %v262, %v573
    %v594 = vsub.f32 %v312, %v576
    %v595 = vsub.f32 %v362, %v579
    %v596 = vsub.f32 %v412, %v582
    %v597 = vsub.f32 %v462, %v585
    %v598 = vsub.f32 %v512, %v588
    %v599 = vsub.f32 %v562, %v591
    %v600 = vmul.f32 %v592, 1.442695
    %v601 = vpow.pop %v600
    %v602 = vmul.f32 %v593, 1.442695
    %v603 = vpow.pop %v602
    %v604 = vmul.f32 %v594, 1.442695
    %v605 = vpow.pop %v604
    %v606 = vmul.f32 %v595, 1.442695
    %v607 = vpow.pop %v606
    %v608 = vmul.f32 %v596, 1.442695
    %v609 = vpow.pop %v608
    %v610 = vmul.f32 %v597, 1.442695
    %v611 = vpow.pop %v610
    %v612 = vmul.f32 %v598, 1.442695
    %v613 = vpow.pop %v612
    %v614 = vmul.f32 %v599, 1.442695
    %v615 = vpow.pop %v614
    %v616 = vsel %vm567, %v601, 0.0
    %617 = vadd.xlane.f32.xlu0 %v616
    %v618 = vpop.xlane.xlu0 %617
    %v619 = vsel %vm567, %v603, 0.0
    %620 = vadd.xlane.f32.xlu0 %v619
    %v621 = vpop.xlane.xlu0 %620
    %v622 = vsel %vm567, %v605, 0.0
    %623 = vadd.xlane.f32.xlu0 %v622
    %v624 = vpop.xlane.xlu0 %623
    %v625 = vsel %vm567, %v607, 0.0
    %626 = vadd.xlane.f32.xlu0 %v625
    %v627 = vpop.xlane.xlu0 %626
    %v628 = vsel %vm567, %v609, 0.0
    %629 = vadd.xlane.f32.xlu0 %v628
    %v630 = vpop.xlane.xlu0 %629
    %v631 = vsel %vm567, %v611, 0.0
    %632 = vadd.xlane.f32.xlu0 %v631
    %v633 = vpop.xlane.xlu0 %632
    %v634 = vsel %vm567, %v613, 0.0
    %635 = vadd.xlane.f32.xlu0 %v634
    %v636 = vpop.xlane.xlu0 %635
    %v637 = vsel %vm567, %v615, 0.0
    %638 = vadd.xlane.f32.xlu0 %v637
    %v639 = vpop.xlane.xlu0 %638
    %v640 = vrcp.pop %v618
    %v641 = vrcp.pop %v621
    %v642 = vrcp.pop %v624
    %v643 = vrcp.pop %v627
    %v644 = vrcp.pop %v630
    %v645 = vrcp.pop %v633
    %v646 = vrcp.pop %v636
    %v647 = vrcp.pop %v639
    %v648 = vmul.f32 %v601, %v640
    %v649 = vmul.f32 %v603, %v641
    %v650 = vmul.f32 %v605, %v642
    %v651 = vmul.f32 %v607, %v643
    %v652 = vmul.f32 %v609, %v644
    %v653 = vmul.f32 %v611, %v645
    %v654 = vmul.f32 %v613, %v646
    %v655 = vmul.f32 %v615, %v647
    %v656 = vpack.c.bf16 %v648, %v648
    %v657 = vpack.c.bf16 %v649, %v649
    %v658 = vpack.c.bf16 %v650, %v650
    %v659 = vpack.c.bf16 %v651, %v651
    %v660 = vpack.c.bf16 %v652, %v652
    %v661 = vpack.c.bf16 %v653, %v653
    %v662 = vpack.c.bf16 %v654, %v654
    %v663 = vpack.c.bf16 %v655, %v655
    %v665 = vsel %vm567, %v656, 0
    %vm667 = vcmask 1043456
    %v669 = vsel %vm667, %v156, 0
    %671 = vmatprep.subr.bf16.mxu0 0
    %672 = vmatpush1.bf16.msra.mxu0 %v669
    %673 = vmatprep.subr.bf16.mxu0 0
    %674 = vmatpush1.bf16.msra.mxu0 0
    %675 = vmatprep.subr.bf16.mxu0 0
    %676 = vmatpush1.bf16.msra.mxu0 0
    %677 = vmatprep.subr.bf16.mxu0 0
    %678 = vmatpush1.bf16.msra.mxu0 0
    %679 = vmatprep.subr.bf16.mxu0 0
    %680 = vmatpush1.bf16.msra.mxu0 0
    %681 = vmatprep.subr.bf16.mxu0 0
    %682 = vmatpush1.bf16.msra.mxu0 0
    %683 = vmatprep.subr.bf16.mxu0 0
    %684 = vmatpush1.bf16.msra.mxu0 0
    %685 = vmatprep.subr.bf16.mxu0 0
    %686 = vmatpush1.bf16.msra.mxu0 0
    %687 = vmatprep.subr.bf16.mxu0 0
    %688 = vmatpush1.bf16.msra.mxu0 0
    %689 = vmatprep.subr.bf16.mxu0 0
    %690 = vmatpush1.bf16.msra.mxu0 0
    %691 = vmatprep.subr.bf16.mxu0 0
    %692 = vmatpush1.bf16.msra.mxu0 0
    %693 = vmatprep.subr.bf16.mxu0 0
    %694 = vmatpush1.bf16.msra.mxu0 0
    %695 = vmatprep.subr.bf16.mxu0 0
    %696 = vmatpush1.bf16.msra.mxu0 0
    %697 = vmatprep.subr.bf16.mxu0 0
    %698 = vmatpush1.bf16.msra.mxu0 0
    %699 = vmatprep.subr.bf16.mxu0 0
    %700 = vmatpush1.bf16.msra.mxu0 0
    %701 = vmatprep.subr.bf16.mxu0 0
    %702 = vmatpush1.bf16.msra.mxu0 0
    %703 = vmatprep.mubr.bf16.mxu0 0
    %704 = vmatmul.mubr.bf16.gmra.mrb[0].mxu0 %v665
    %v705 = vpop.f32.mrb[0].mxu0
    %v706 = vadd.f32 0.0, %v705
    %v707 = vpop.f32.mrb[0].mxu0
    %v708 = vpop.f32.mrb[0].mxu0
    %v709 = vpop.f32.mrb[0].mxu0
    %710 = vdwg.mxu0
    %v712 = vsel %vm567, %v657, 0
    %v715 = vsel %vm667, %v157, 0
    %717 = vmatprep.subr.bf16.mxu0 0
    %718 = vmatpush1.bf16.msra.mxu0 %v715
    %719 = vmatprep.subr.bf16.mxu0 0
    %720 = vmatpush1.bf16.msra.mxu0 0
    %721 = vmatprep.subr.bf16.mxu0 0
    %722 = vmatpush1.bf16.msra.mxu0 0
    %723 = vmatprep.subr.bf16.mxu0 0
    %724 = vmatpush1.bf16.msra.mxu0 0
    %725 = vmatprep.subr.bf16.mxu0 0
    %726 = vmatpush1.bf16.msra.mxu0 0
    %727 = vmatprep.subr.bf16.mxu0 0
    %728 = vmatpush1.bf16.msra.mxu0 0
    %729 = vmatprep.subr.bf16.mxu0 0
    %730 = vmatpush1.bf16.msra.mxu0 0
    %731 = vmatprep.subr.bf16.mxu0 0
    %732 = vmatpush1.bf16.msra.mxu0 0
    %733 = vmatprep.subr.bf16.mxu0 0
    %734 = vmatpush1.bf16.msra.mxu0 0
    %735 = vmatprep.subr.bf16.mxu0 0
    %736 = vmatpush1.bf16.msra.mxu0 0
    %737 = vmatprep.subr.bf16.mxu0 0
    %738 = vmatpush1.bf16.msra.mxu0 0
    %739 = vmatprep.subr.bf16.mxu0 0
    %740 = vmatpush1.bf16.msra.mxu0 0
    %741 = vmatprep.subr.bf16.mxu0 0
    %742 = vmatpush1.bf16.msra.mxu0 0
    %743 = vmatprep.subr.bf16.mxu0 0
    %744 = vmatpush1.bf16.msra.mxu0 0
    %745 = vmatprep.subr.bf16.mxu0 0
    %746 = vmatpush1.bf16.msra.mxu0 0
    %747 = vmatprep.subr.bf16.mxu0 0
    %748 = vmatpush1.bf16.msra.mxu0 0
    %749 = vmatprep.mubr.bf16.mxu0 0
    %750 = vmatmul.mubr.bf16.gmra.mrb[0].mxu0 %v712
    %v751 = vpop.f32.mrb[0].mxu0
    %v752 = vadd.f32 0.0, %v751
    %v753 = vpop.f32.mrb[0].mxu0
    %v754 = vpop.f32.mrb[0].mxu0
    %v755 = vpop.f32.mrb[0].mxu0
    %756 = vdwg.mxu0
    %v758 = vsel %vm567, %v658, 0
    %v761 = vsel %vm667, %v159, 0
    %763 = vmatprep.subr.bf16.mxu0 0
    %764 = vmatpush1.bf16.msra.mxu0 %v761
    %765 = vmatprep.subr.bf16.mxu0 0
    %766 = vmatpush1.bf16.msra.mxu0 0
    %767 = vmatprep.subr.bf16.mxu0 0
    %768 = vmatpush1.bf16.msra.mxu0 0
    %769 = vmatprep.subr.bf16.mxu0 0
    %770 = vmatpush1.bf16.msra.mxu0 0
    %771 = vmatprep.subr.bf16.mxu0 0
    %772 = vmatpush1.bf16.msra.mxu0 0
    %773 = vmatprep.subr.bf16.mxu0 0
    %774 = vmatpush1.bf16.msra.mxu0 0
    %775 = vmatprep.subr.bf16.mxu0 0
    %776 = vmatpush1.bf16.msra.mxu0 0
    %777 = vmatprep.subr.bf16.mxu0 0
    %778 = vmatpush1.bf16.msra.mxu0 0
    %779 = vmatprep.subr.bf16.mxu0 0
    %780 = vmatpush1.bf16.msra.mxu0 0
    %781 = vmatprep.subr.bf16.mxu0 0
    %782 = vmatpush1.bf16.msra.mxu0 0
    %783 = vmatprep.subr.bf16.mxu0 0
    %784 = vmatpush1.bf16.msra.mxu0 0
    %785 = vmatprep.subr.bf16.mxu0 0
    %786 = vmatpush1.bf16.msra.mxu0 0
    %787 = vmatprep.subr.bf16.mxu0 0
    %788 = vmatpush1.bf16.msra.mxu0 0
    %789 = vmatprep.subr.bf16.mxu0 0
    %790 = vmatpush1.bf16.msra.mxu0 0
    %791 = vmatprep.subr.bf16.mxu0 0
    %792 = vmatpush1.bf16.msra.mxu0 0
    %793 = vmatprep.subr.bf16.mxu0 0
    %794 = vmatpush1.bf16.msra.mxu0 0
    %795 = vmatprep.mubr.bf16.mxu0 0
    %796 = vmatmul.mubr.bf16.gmra.mrb[0].mxu0 %v758
    %v797 = vpop.f32.mrb[0].mxu0
    %v798 = vadd.f32 0.0, %v797
    %v799 = vpop.f32.mrb[0].mxu0
    %v800 = vpop.f32.mrb[0].mxu0
    %v801 = vpop.f32.mrb[0].mxu0
    %802 = vdwg.mxu0
    %v804 = vsel %vm567, %v659, 0
    %v807 = vsel %vm667, %v161, 0
    %809 = vmatprep.subr.bf16.mxu0 0
    %810 = vmatpush1.bf16.msra.mxu0 %v807
    %811 = vmatprep.subr.bf16.mxu0 0
    %812 = vmatpush1.bf16.msra.mxu0 0
    %813 = vmatprep.subr.bf16.mxu0 0
    %814 = vmatpush1.bf16.msra.mxu0 0
    %815 = vmatprep.subr.bf16.mxu0 0
    %816 = vmatpush1.bf16.msra.mxu0 0
    %817 = vmatprep.subr.bf16.mxu0 0
    %818 = vmatpush1.bf16.msra.mxu0 0
    %819 = vmatprep.subr.bf16.mxu0 0
    %820 = vmatpush1.bf16.msra.mxu0 0
    %821 = vmatprep.subr.bf16.mxu0 0
    %822 = vmatpush1.bf16.msra.mxu0 0
    %823 = vmatprep.subr.bf16.mxu0 0
    %824 = vmatpush1.bf16.msra.mxu0 0
    %825 = vmatprep.subr.bf16.mxu0 0
    %826 = vmatpush1.bf16.msra.mxu0 0
    %827 = vmatprep.subr.bf16.mxu0 0
    %828 = vmatpush1.bf16.msra.mxu0 0
    %829 = vmatprep.subr.bf16.mxu0 0
    %830 = vmatpush1.bf16.msra.mxu0 0
    %831 = vmatprep.subr.bf16.mxu0 0
    %832 = vmatpush1.bf16.msra.mxu0 0
    %833 = vmatprep.subr.bf16.mxu0 0
    %834 = vmatpush1.bf16.msra.mxu0 0
    %835 = vmatprep.subr.bf16.mxu0 0
    %836 = vmatpush1.bf16.msra.mxu0 0
    %837 = vmatprep.subr.bf16.mxu0 0
    %838 = vmatpush1.bf16.msra.mxu0 0
    %839 = vmatprep.subr.bf16.mxu0 0
    %840 = vmatpush1.bf16.msra.mxu0 0
    %841 = vmatprep.mubr.bf16.mxu0 0
    %842 = vmatmul.mubr.bf16.gmra.mrb[0].mxu0 %v804
    %v843 = vpop.f32.mrb[0].mxu0
    %v844 = vadd.f32 0.0, %v843
    %v845 = vpop.f32.mrb[0].mxu0
    %v846 = vpop.f32.mrb[0].mxu0
    %v847 = vpop.f32.mrb[0].mxu0
    %848 = vdwg.mxu0
    %v850 = vsel %vm567, %v660, 0
    %v853 = vsel %vm667, %v163, 0
    %855 = vmatprep.subr.bf16.mxu0 0
    %856 = vmatpush1.bf16.msra.mxu0 %v853
    %857 = vmatprep.subr.bf16.mxu0 0
    %858 = vmatpush1.bf16.msra.mxu0 0
    %859 = vmatprep.subr.bf16.mxu0 0
    %860 = vmatpush1.bf16.msra.mxu0 0
    %861 = vmatprep.subr.bf16.mxu0 0
    %862 = vmatpush1.bf16.msra.mxu0 0
    %863 = vmatprep.subr.bf16.mxu0 0
    %864 = vmatpush1.bf16.msra.mxu0 0
    %865 = vmatprep.subr.bf16.mxu0 0
    %866 = vmatpush1.bf16.msra.mxu0 0
    %867 = vmatprep.subr.bf16.mxu0 0
    %868 = vmatpush1.bf16.msra.mxu0 0
    %869 = vmatprep.subr.bf16.mxu0 0
    %870 = vmatpush1.bf16.msra.mxu0 0
    %871 = vmatprep.subr.bf16.mxu0 0
    %872 = vmatpush1.bf16.msra.mxu0 0
    %873 = vmatprep.subr.bf16.mxu0 0
    %874 = vmatpush1.bf16.msra.mxu0 0
    %875 = vmatprep.subr.bf16.mxu0 0
    %876 = vmatpush1.bf16.msra.mxu0 0
    %877 = vmatprep.subr.bf16.mxu0 0
    %878 = vmatpush1.bf16.msra.mxu0 0
    %879 = vmatprep.subr.bf16.mxu0 0
    %880 = vmatpush1.bf16.msra.mxu0 0
    %881 = vmatprep.subr.bf16.mxu0 0
    %882 = vmatpush1.bf16.msra.mxu0 0
    %883 = vmatprep.subr.bf16.mxu0 0
    %884 = vmatpush1.bf16.msra.mxu0 0
    %885 = vmatprep.subr.bf16.mxu0 0
    %886 = vmatpush1.bf16.msra.mxu0 0
    %887 = vmatprep.mubr.bf16.mxu0 0
    %888 = vmatmul.mubr.bf16.gmra.mrb[0].mxu0 %v850
    %v889 = vpop.f32.mrb[0].mxu0
    %v890 = vadd.f32 0.0, %v889
    %v891 = vpop.f32.mrb[0].mxu0
    %v892 = vpop.f32.mrb[0].mxu0
    %v893 = vpop.f32.mrb[0].mxu0
    %894 = vdwg.mxu0
    %v896 = vsel %vm567, %v661, 0
    %v899 = vsel %vm667, %v165, 0
    %901 = vmatprep.subr.bf16.mxu0 0
    %902 = vmatpush1.bf16.msra.mxu0 %v899
    %903 = vmatprep.subr.bf16.mxu0 0
    %904 = vmatpush1.bf16.msra.mxu0 0
    %905 = vmatprep.subr.bf16.mxu0 0
    %906 = vmatpush1.bf16.msra.mxu0 0
    %907 = vmatprep.subr.bf16.mxu0 0
    %908 = vmatpush1.bf16.msra.mxu0 0
    %909 = vmatprep.subr.bf16.mxu0 0
    %910 = vmatpush1.bf16.msra.mxu0 0
    %911 = vmatprep.subr.bf16.mxu0 0
    %912 = vmatpush1.bf16.msra.mxu0 0
    %913 = vmatprep.subr.bf16.mxu0 0
    %914 = vmatpush1.bf16.msra.mxu0 0
    %915 = vmatprep.subr.bf16.mxu0 0
    %916 = vmatpush1.bf16.msra.mxu0 0
    %917 = vmatprep.subr.bf16.mxu0 0
    %918 = vmatpush1.bf16.msra.mxu0 0
    %919 = vmatprep.subr.bf16.mxu0 0
    %920 = vmatpush1.bf16.msra.mxu0 0
    %921 = vmatprep.subr.bf16.mxu0 0
    %922 = vmatpush1.bf16.msra.mxu0 0
    %923 = vmatprep.subr.bf16.mxu0 0
    %924 = vmatpush1.bf16.msra.mxu0 0
    %925 = vmatprep.subr.bf16.mxu0 0
    %926 = vmatpush1.bf16.msra.mxu0 0
    %927 = vmatprep.subr.bf16.mxu0 0
    %928 = vmatpush1.bf16.msra.mxu0 0
    %929 = vmatprep.subr.bf16.mxu0 0
    %930 = vmatpush1.bf16.msra.mxu0 0
    %931 = vmatprep.subr.bf16.mxu0 0
    %932 = vmatpush1.bf16.msra.mxu0 0
    %933 = vmatprep.mubr.bf16.mxu0 0
    %934 = vmatmul.mubr.bf16.gmra.mrb[0].mxu0 %v896
    %v935 = vpop.f32.mrb[0].mxu0
    %v936 = vadd.f32 0.0, %v935
    %v937 = vpop.f32.mrb[0].mxu0
    %v938 = vpop.f32.mrb[0].mxu0
    %v939 = vpop.f32.mrb[0].mxu0
    %940 = vdwg.mxu0
    %v942 = vsel %vm567, %v662, 0
    %v945 = vsel %vm667, %v167, 0
    %947 = vmatprep.subr.bf16.mxu0 0
    %948 = vmatpush1.bf16.msra.mxu0 %v945
    %949 = vmatprep.subr.bf16.mxu0 0
    %950 = vmatpush1.bf16.msra.mxu0 0
    %951 = vmatprep.subr.bf16.mxu0 0
    %952 = vmatpush1.bf16.msra.mxu0 0
    %953 = vmatprep.subr.bf16.mxu0 0
    %954 = vmatpush1.bf16.msra.mxu0 0
    %955 = vmatprep.subr.bf16.mxu0 0
    %956 = vmatpush1.bf16.msra.mxu0 0
    %957 = vmatprep.subr.bf16.mxu0 0
    %958 = vmatpush1.bf16.msra.mxu0 0
    %959 = vmatprep.subr.bf16.mxu0 0
    %960 = vmatpush1.bf16.msra.mxu0 0
    %961 = vmatprep.subr.bf16.mxu0 0
    %962 = vmatpush1.bf16.msra.mxu0 0
    %963 = vmatprep.subr.bf16.mxu0 0
    %964 = vmatpush1.bf16.msra.mxu0 0
    %965 = vmatprep.subr.bf16.mxu0 0
    %966 = vmatpush1.bf16.msra.mxu0 0
    %967 = vmatprep.subr.bf16.mxu0 0
    %968 = vmatpush1.bf16.msra.mxu0 0
    %969 = vmatprep.subr.bf16.mxu0 0
    %970 = vmatpush1.bf16.msra.mxu0 0
    %971 = vmatprep.subr.bf16.mxu0 0
    %972 = vmatpush1.bf16.msra.mxu0 0
    %973 = vmatprep.subr.bf16.mxu0 0
    %974 = vmatpush1.bf16.msra.mxu0 0
    %975 = vmatprep.subr.bf16.mxu0 0
    %976 = vmatpush1.bf16.msra.mxu0 0
    %977 = vmatprep.subr.bf16.mxu0 0
    %978 = vmatpush1.bf16.msra.mxu0 0
    %979 = vmatprep.mubr.bf16.mxu0 0
    %980 = vmatmul.mubr.bf16.gmra.mrb[0].mxu0 %v942
    %v981 = vpop.f32.mrb[0].mxu0
    %v982 = vadd.f32 0.0, %v981
    %v983 = vpop.f32.mrb[0].mxu0
    %v984 = vpop.f32.mrb[0].mxu0
    %v985 = vpop.f32.mrb[0].mxu0
    %986 = vdwg.mxu0
    %v988 = vsel %vm567, %v663, 0
    %v991 = vsel %vm667, %v169, 0
    %993 = vmatprep.subr.bf16.mxu0 0
    %994 = vmatpush1.bf16.msra.mxu0 %v991
    %995 = vmatprep.subr.bf16.mxu0 0
    %996 = vmatpush1.bf16.msra.mxu0 0
    %997 = vmatprep.subr.bf16.mxu0 0
    %998 = vmatpush1.bf16.msra.mxu0 0
    %999 = vmatprep.subr.bf16.mxu0 0
    %1000 = vmatpush1.bf16.msra.mxu0 0
    %1001 = vmatprep.subr.bf16.mxu0 0
    %1002 = vmatpush1.bf16.msra.mxu0 0
    %1003 = vmatprep.subr.bf16.mxu0 0
    %1004 = vmatpush1.bf16.msra.mxu0 0
    %1005 = vmatprep.subr.bf16.mxu0 0
    %1006 = vmatpush1.bf16.msra.mxu0 0
    %1007 = vmatprep.subr.bf16.mxu0 0
    %1008 = vmatpush1.bf16.msra.mxu0 0
    %1009 = vmatprep.subr.bf16.mxu0 0
    %1010 = vmatpush1.bf16.msra.mxu0 0
    %1011 = vmatprep.subr.bf16.mxu0 0
    %1012 = vmatpush1.bf16.msra.mxu0 0
    %1013 = vmatprep.subr.bf16.mxu0 0
    %1014 = vmatpush1.bf16.msra.mxu0 0
    %1015 = vmatprep.subr.bf16.mxu0 0
    %1016 = vmatpush1.bf16.msra.mxu0 0
    %1017 = vmatprep.subr.bf16.mxu0 0
    %1018 = vmatpush1.bf16.msra.mxu0 0
    %1019 = vmatprep.subr.bf16.mxu0 0
    %1020 = vmatpush1.bf16.msra.mxu0 0
    %1021 = vmatprep.subr.bf16.mxu0 0
    %1022 = vmatpush1.bf16.msra.mxu0 0
    %1023 = vmatprep.subr.bf16.mxu0 0
    %1024 = vmatpush1.bf16.msra.mxu0 0
    %1025 = vmatprep.mubr.bf16.mxu0 0
    %1026 = vmatmul.mubr.bf16.gmra.mrb[0].mxu0 %v988
    %v1027 = vpop.f32.mrb[0].mxu0
    %v1028 = vadd.f32 0.0, %v1027
    %v1029 = vpop.f32.mrb[0].mxu0
    %v1030 = vpop.f32.mrb[0].mxu0
    %v1031 = vpop.f32.mrb[0].mxu0
    %1032 = vdwg.mxu0
    %v1033 = vpack.c.bf16 %v706, %v706
    %v1034 = vpack.c.bf16 %v752, %v752
    %v1035 = vpack.c.bf16 %v798, %v798
    %v1036 = vpack.c.bf16 %v844, %v844
    %v1037 = vpack.c.bf16 %v890, %v890
    %v1038 = vpack.c.bf16 %v936, %v936
    %v1039 = vpack.c.bf16 %v982, %v982
    %v1040 = vpack.c.bf16 %v1028, %v1028
    %v1043 = vunpack.c.l.b16 %v1033
    %v1044 = vunpack.c.l.b16 %v1034
    %v1045 = vpack.c.b16 %v1044, %v1043
    %v1048 = vunpack.c.l.b16 %v1035
    %v1049 = vunpack.c.l.b16 %v1036
    %v1050 = vpack.c.b16 %v1049, %v1048
    %1051 = vrot.lane.b32.xlu0 %v1050, 16
    %v1052 = vpop.permute.xlu0 %1051
    %v1055 = vunpack.c.l.b16 %v1037
    %v1056 = vunpack.c.l.b16 %v1038
    %v1057 = vpack.c.b16 %v1056, %v1055
    %1058 = vrot.lane.b32.xlu0 %v1057, 32
    %v1059 = vpop.permute.xlu0 %1058
    %v1062 = vunpack.c.l.b16 %v1039
    %v1063 = vunpack.c.l.b16 %v1040
    %v1064 = vpack.c.b16 %v1063, %v1062
    %1065 = vrot.lane.b32.xlu0 %v1064, 48
    %v1066 = vpop.permute.xlu0 %1065
    %v1069 = vsel %vm172, %v1045, %v1052
    %v1071 = vsel %vm21, %v1069, %v1059
    %vm1072 = vcmask 392192
    %v1074 = vsel %vm1072, %v1071, %v1066
    %v1075 = vld [vmem:[%s3] sm:$0xf]
    %v1076 = vld [vmem:[%s3 + $0x4] sm:$0xf]
    %v1077 = vld [vmem:[%s3 + $0x8] sm:$0xf]
    %v1078 = vld [vmem:[%s3 + $0xc] sm:$0xf]
    %v1079 = vld [vmem:[%s3 + $0x10] sm:$0xf]
    %v1080 = vld [vmem:[%s3 + $0x14] sm:$0xf]
    %v1081 = vld [vmem:[%s3 + $0x18] sm:$0xf]
    %v1082 = vld [vmem:[%s3 + $0x1c] sm:$0xf]
    %v1083 = vld [vmem:[%s1 + $0x2] sm:$0x1]
    %v1084 = vlaneseq
    %v1085 = vshrl.u32 %v1084, 7
    %v1086 = vsub.s32 0, %v1085
    %v1087 = vrot.slane %v1083, %v1086
    %v1096 = vunpack.c.l.b16 %v1075
    %v1097 = vunpack.c.l.b16 %v1076
    %v1098 = vunpack.c.l.b16 %v1077
    %v1099 = vunpack.c.l.b16 %v1078
    %v1100 = vunpack.c.l.b16 %v1079
    %v1101 = vunpack.c.l.b16 %v1080
    %v1102 = vunpack.c.l.b16 %v1081
    %v1103 = vunpack.c.l.b16 %v1082
    %v1104 = vpack.c.b16 %v1097, %v1096
    %v1105 = vpack.c.b16 %v1099, %v1098
    %v1106 = vpack.c.b16 %v1101, %v1100
    %v1107 = vpack.c.b16 %v1103, %v1102
    %vm1112 = vcmask 523264
    %v1113 = vsel %vm1112, %v1074, 0
    %1115 = vmatprep.subr.bf16.mxu0 0
    %1116 = vmatpush1.bf16.msra.mxu0 %v1104
    %1117 = vmatprep.subr.bf16.mxu0 0
    %1118 = vmatpush1.bf16.msra.mxu0 %v1105
    %1119 = vmatprep.subr.bf16.mxu0 0
    %1120 = vmatpush1.bf16.msra.mxu0 %v1106
    %1121 = vmatprep.subr.bf16.mxu0 0
    %1122 = vmatpush1.bf16.msra.mxu0 %v1107
    %1123 = vmatprep.subr.bf16.mxu0 0
    %1124 = vmatpush1.bf16.msra.mxu0 0
    %1125 = vmatprep.subr.bf16.mxu0 0
    %1126 = vmatpush1.bf16.msra.mxu0 0
    %1127 = vmatprep.subr.bf16.mxu0 0
    %1128 = vmatpush1.bf16.msra.mxu0 0
    %1129 = vmatprep.subr.bf16.mxu0 0
    %1130 = vmatpush1.bf16.msra.mxu0 0
    %1131 = vmatprep.subr.bf16.mxu0 0
    %1132 = vmatpush1.bf16.msra.mxu0 0
    %1133 = vmatprep.subr.bf16.mxu0 0
    %1134 = vmatpush1.bf16.msra.mxu0 0
    %1135 = vmatprep.subr.bf16.mxu0 0
    %1136 = vmatpush1.bf16.msra.mxu0 0
    %1137 = vmatprep.subr.bf16.mxu0 0
    %1138 = vmatpush1.bf16.msra.mxu0 0
    %1139 = vmatprep.subr.bf16.mxu0 0
    %1140 = vmatpush1.bf16.msra.mxu0 0
    %1141 = vmatprep.subr.bf16.mxu0 0
    %1142 = vmatpush1.bf16.msra.mxu0 0
    %1143 = vmatprep.subr.bf16.mxu0 0
    %1144 = vmatpush1.bf16.msra.mxu0 0
    %1145 = vmatprep.subr.bf16.mxu0 0
    %1146 = vmatpush1.bf16.msra.mxu0 0
    %1147 = vmatprep.mubr.bf16.mxu0 0
    %1148 = vmatmul.mubr.bf16.gmra.mrb[0].mxu0 %v1113
    %v1149 = vpop.f32.mrb[0].mxu0
    %v1150 = vadd.f32 %v1087, %v1149
    %v1151 = vpop.f32.mrb[0].mxu0
    %v1152 = vpop.f32.mrb[0].mxu0
    %v1153 = vadd.f32 %v1087, %v1152
    %v1154 = vpop.f32.mrb[0].mxu0
    %1155 = vdwg.mxu0
    %1156 = vst.msk [vmem:[#allocation2] sm:$0xff] %vm21, %v1150
    %1157 = vst.msk [vmem:[#allocation2 + $0x8] sm:$0xff] %vm21, %v1153
    // Predicated region
    $region18: #{tpu_custom_call.1} parent=1 // pred_check
      _
    $region19: #{tpu_custom_call.1} parent=1 // pred_check_branch
      %1159 = sbr.rel (0) target = $region21
    $region20: #{tpu_custom_call.1} parent=1 // pred_region
      %s1161 = ssub.s32 256, 256
      %1162 = vsyncadd [#allocation3], %s1161
      %s1163 = sshll.u32 [#allocation2], 4
      %s1164 = int_to_ptr.vmem [resolvable:$true] %s1163
      %1169 = dma.vmem_to_hbm [thread:$0]  %s1164, 256, %s4, [#allocation3], 128, 128, 8
    $region21: #{tpu_custom_call.1} parent=1 // pred_fallthru
      _
    // Predicated region
    $region22: #{tpu_custom_call.1} parent=1 // pred_check
      _
    $region23: #{tpu_custom_call.1} parent=1 // pred_check_branch
      %1171 = sbr.rel (0) target = $region25
    $region24: #{tpu_custom_call.1} parent=1 // pred_region
      %1172 = dma.done [#allocation3], 256
    $region25: #{tpu_custom_call.1} parent=1 // pred_fallthru
      _
    %1173 = vsyncpa [#allocation3], 1

</llo_original>
